<compile_context>
chip_gen: v5e
topology: v5e:2x2
jax: 0.10.0
libtpu: 0.0.40
codegen_flags: <defaults>
</compile_context>

<pallas_src>
import jax
import jax.numpy as jnp
from jax.experimental import pallas as pl
from jax.experimental.pallas import tpu as pltpu


def _sigmoid_kernel(x_ref, o_ref):
    # TODO(synk): on v6e/v7x, bf16 inputs could stay in bf16 (native VPU/EUP)
    # to halve temporary pressure; kept in f32 to match PyTorch float opmath.
    xf = x_ref[...].astype(jnp.float32)
    y = 0.5 * (1.0 + jnp.tanh(0.5 * xf))  # sigmoid(x), one transcendental
    o_ref[...] = y.astype(o_ref.dtype)


def _cost(n: int, itemsize: int) -> pl.CostEstimate:
    return pl.CostEstimate(
        flops=4 * n, transcendentals=n, bytes_accessed=2 * n * itemsize
    )


def _sigmoid_flat_1d(flat: jax.Array, cost: pl.CostEstimate) -> jax.Array:
    """Fallback when the element count isn't divisible by 128: run directly on
    the flat 1-D array (no pad, no slice). Ragged last block is masked."""
    n = flat.shape[0]
    block = 64 * 1024  # modest block: VMEM-safe even with a conservative 1-D layout
    if n <= block:
        block = n  # block == full array dim -> no 128-divisibility requirement
        grid = (1,)
    else:
        grid = (pl.cdiv(n, block),)  # ragged last block -> masked writes
    return pl.pallas_call(
        _sigmoid_kernel,
        out_shape=jax.ShapeDtypeStruct((n,), flat.dtype),
        grid=grid,
        in_specs=[pl.BlockSpec((block,), lambda i: (i,))],
        out_specs=pl.BlockSpec((block,), lambda i: (i,)),
        compiler_params=pltpu.CompilerParams(dimension_semantics=("parallel",)),
        cost_estimate=cost,
    )(flat)


def sigmoid_pallas(x: jax.Array, *, target_block_bytes: int = 2 << 20) -> jax.Array:
    """Elementwise sigmoid matching torch.Tensor.sigmoid()."""
    orig_shape = x.shape
    orig_dtype = x.dtype
    n = x.size
    if n == 0:
        return x

    flat = x.reshape(-1)  # contiguous reshape: free bitcast, no HBM pass
    itemsize = jnp.dtype(orig_dtype).itemsize
    cost = _cost(n, itemsize)

    # Largest lane width in {512, 256, 128} that divides n -> full-width,
    # unmasked stores with no padding pass.
    lanes = next((c for c in (512, 256, 128) if n % c == 0), None)
    if lanes is None:
        return _sigmoid_flat_1d(flat, cost).reshape(orig_shape)

    rows = n // lanes
    x2d = flat.reshape(rows, lanes)  # free bitcast

    if rows <= 8:
        block_rows = rows  # block dims == array dims: no (8,128) requirement
        grid = (1,)
    else:
        # Size blocks by the in-kernel f32 footprint (bf16/fp16 inputs are
        # upcast), keep a multiple of 8 sublanes, and prefer >=4 grid steps
        # when possible (v7x megacore sharding + DMA/compute overlap).
        compute_itemsize = max(itemsize, 4)
        target_rows = max(
            8, (target_block_bytes // (lanes * compute_itemsize)) // 8 * 8
        )
        cap_rows = max(8, (rows // 4) // 8 * 8)
        block_rows = min(target_rows, cap_rows)
        grid = (pl.cdiv(rows, block_rows),)  # ragged last block is masked

    out2d = pl.pallas_call(
        _sigmoid_kernel,
        out_shape=jax.ShapeDtypeStruct((rows, lanes), orig_dtype),
        grid=grid,
        in_specs=[pl.BlockSpec((block_rows, lanes), lambda i: (i, 0))],
        out_specs=pl.BlockSpec((block_rows, lanes), lambda i: (i, 0)),
        compiler_params=pltpu.CompilerParams(dimension_semantics=("parallel",)),
        cost_estimate=cost,
    )(x2d)
    return out2d.reshape(orig_shape)


if __name__ == "__main__":
    key0, key1 = jax.random.split(jax.random.PRNGKey(0))

    # NCHW, consistent with the PyTorch module's typical conv-stack usage.
    x = jax.random.normal(key0, (2, 4, 16, 16), dtype=jnp.float32)
    y = jax.block_until_ready(sigmoid_pallas(x))
    y_ref = jax.nn.sigmoid(x)
    assert y.shape == x.shape and y.dtype == x.dtype
    assert jnp.allclose(y, y_ref, atol=1e-6, rtol=1e-6)

    # Odd element count (105, not divisible by 128): exercises the
    # no-pad / no-slice 1-D fallback path.
    x_odd = jax.random.normal(key1, (3, 5, 7), dtype=jnp.float32)
    y_odd = jax.block_until_ready(sigmoid_pallas(x_odd))
    assert jnp.allclose(y_odd, jax.nn.sigmoid(x_odd), atol=1e-6, rtol=1e-6)

    # TODO(synk): the PyTorch `inplace` flag has no meaning under JAX's
    # functional semantics; the out-of-place result is returned in both cases.

    print("KERNEL_OK")
</pallas_src>

<mosaic_0001>
module attributes {stable_mosaic.version = 11 : i64} {
  func.func @_sigmoid_kernel(%arg0: i32, %arg1: memref<4x512xf32, #tpu.memory_space<vmem>>, %arg2: memref<4x512xf32, #tpu.memory_space<vmem>>) attributes {dimension_semantics = [#tpu.dimension_semantics<parallel>], iteration_bounds = array<i64: 1>, scalar_prefetch = 0 : i64, scratch_operands = 0 : i64, tpu.core_type = #tpu.core_type<tc>, window_params = [{transform_indices = @transform_0, window_bounds = array<i64: 4, 512>}, {transform_indices = @transform_1, window_bounds = array<i64: 4, 512>}]} {
    %c0 = arith.constant 0 : index
    %c0_0 = arith.constant 0 : index
    %0 = vector.load %arg1[%c0, %c0_0] : memref<4x512xf32, #tpu.memory_space<vmem>>, vector<4x512xf32>
    %cst = arith.constant 5.000000e-01 : f32
    %1 = vector.broadcast %cst : f32 to vector<4x512xf32>
    %2 = arith.mulf %1, %0 : vector<4x512xf32>
    %3 = math.tanh %2 : vector<4x512xf32>
    %cst_1 = arith.constant 1.000000e+00 : f32
    %4 = vector.broadcast %cst_1 : f32 to vector<4x512xf32>
    %5 = arith.addf %4, %3 : vector<4x512xf32>
    %cst_2 = arith.constant 5.000000e-01 : f32
    %6 = vector.broadcast %cst_2 : f32 to vector<4x512xf32>
    %7 = arith.mulf %6, %5 : vector<4x512xf32>
    %c0_3 = arith.constant 0 : index
    %c0_4 = arith.constant 0 : index
    %8 = vector.load %arg2[%c0_3, %c0_4] : memref<4x512xf32, #tpu.memory_space<vmem>>, vector<4x512xf32>
    tpu.vector_store %arg2[%c0_3, %c0_4], %7 {strides = array<i32>} : memref<4x512xf32, #tpu.memory_space<vmem>>, vector<4x512xf32>,
    return
  }
  func.func @transform_0(%arg0: i32) -> (i32, i32) {
    %c0_i32 = arith.constant 0 : i32
    %c0_i32_0 = arith.constant 0 : i32
    return %arg0, %c0_i32 : i32, i32
  }
  func.func @transform_1(%arg0: i32) -> (i32, i32) {
    %c0_i32 = arith.constant 0 : i32
    %c0_i32_0 = arith.constant 0 : i32
    return %arg0, %c0_i32 : i32, i32
  }
}

</mosaic_0001>

<llo_original>
// kernel: tpu_custom_call.1
$region0: #{tpu_custom_call.1}
  #allocation0 [shape = 'u32[]', space=smem, size = 0x4, offset = 0x4, fixed_abs, tag = 'smem constant byte address 0x4 - core index']
  #allocation1 [shape = 'u32[72,128]{1,0:T(1,128)}', space=vmem, size = 0x9000, scoped, tag = 'internal scratch']
  %s0 = inlined_call_operand.hbm [shape: f32[4,512], index: 0, kind: input, shape index: {}]
  %s1 = inlined_call_operand.hbm [shape: f32[4,512], index: 1, kind: output, shape index: {}]
  %s2 = sld [smem:[#allocation0]]
  $region18: #{tpu_custom_call.1} parent=0
    _
  %s4 = ssub.s32 1, %s2
  %s5 = scalar_select 0, %s4, %s2
  $region1: #{tpu_custom_call.1} parent=0
    #allocation2 [shape = 'u8[8192]{0}', space=vmem, size = 0x2000, scoped, tag = 'input window, operand 0, single buffered']
    #allocation3 [shape = 's32[1]{0}', space=sflag, size = 0x4, scoped, tag = 'scoped memory for tpu_custom_call.1']
    #allocation4 [shape = 's32[1]{0}', space=sflag, size = 0x4, scoped, tag = 'scoped memory for tpu_custom_call.1']
    #allocation5 [shape = 'u8[8192]{0}', space=vmem, size = 0x2000, scoped, tag = 'output window, operand 0, single buffered']
    %6 = vsyncpa [#allocation3], 0
    %7 = vsyncpa [#allocation4], 0
    // Predicated region
    $region2: #{tpu_custom_call.1} parent=1 // pred_check
      _
    $region3: #{tpu_custom_call.1} parent=1 // pred_check_branch
      %9 = sbr.rel (0) target = $region5
    $region4: #{tpu_custom_call.1} parent=1 // pred_region
      %11 = vsyncadd [#allocation3], 0
      %s13 = sshll.u32 %s0, 4
      %s14 = int_to_ptr.hbm [resolvable:$true] %s13
      %s15 = sshll.u32 [#allocation2], 4
      %s16 = int_to_ptr.vmem [resolvable:$true] %s15
      %18 = dma.hbm_to_vmem [thread:$0]  %s14, 256, %s16, [#allocation3]
    $region5: #{tpu_custom_call.1} parent=1 // pred_fallthru
      _
    // Predicated region
    $region6: #{tpu_custom_call.1} parent=1 // pred_check
      _
    $region7: #{tpu_custom_call.1} parent=1 // pred_check_branch
      %20 = sbr.rel (0) target = $region9
    $region8: #{tpu_custom_call.1} parent=1 // pred_region
      %22 = dma.done [#allocation3], 256
    $region9: #{tpu_custom_call.1} parent=1 // pred_fallthru
      _
    %v23 = vld [vmem:[#allocation2] sm:$0xff]
    %v24 = vld [vmem:[#allocation2 + $0x8] sm:$0xff]
    %v25 = vmul.f32 %v23, 0.5
    %v26 = vmul.f32 %v24, 0.5
    %v27 = vtanh.pop %v25
    %v28 = vtanh.pop %v26
    %v29 = vadd.f32 %v27, 1.0
    %v30 = vadd.f32 %v28, 1.0
    %v31 = vmul.f32 %v29, 0.5
    %v32 = vmul.f32 %v30, 0.5
    %33 = vst [vmem:[#allocation5] sm:$0xff] %v31
    %34 = vst [vmem:[#allocation5 + $0x8] sm:$0xff] %v32
    // Predicated region
    $region10: #{tpu_custom_call.1} parent=1 // pred_check
      _
    $region11: #{tpu_custom_call.1} parent=1 // pred_check_branch
      %36 = sbr.rel (0) target = $region13
    $region12: #{tpu_custom_call.1} parent=1 // pred_region
      %38 = vsyncadd [#allocation4], 0
      %s40 = sshll.u32 [#allocation5], 4
      %s41 = int_to_ptr.vmem [resolvable:$true] %s40
      %s42 = sshll.u32 %s1, 4
      %s43 = int_to_ptr.hbm [resolvable:$true] %s42
      %45 = dma.vmem_to_hbm [thread:$0]  %s41, 256, %s43, [#allocation4]
    $region13: #{tpu_custom_call.1} parent=1 // pred_fallthru
      _
    // Predicated region
    $region14: #{tpu_custom_call.1} parent=1 // pred_check
      _
    $region15: #{tpu_custom_call.1} parent=1 // pred_check_branch
      %47 = sbr.rel (0) target = $region17
    $region16: #{tpu_custom_call.1} parent=1 // pred_region
      %49 = dma.done [#allocation4], 256
    $region17: #{tpu_custom_call.1} parent=1 // pred_fallthru
      _
    %50 = vsyncpa [#allocation3], 1
    %51 = vsyncpa [#allocation4], 1

</llo_original>
